<compile_context>
chip_gen: v7x
topology: tpu7x:2x2x1
jax: 0.10.0
libtpu: 0.0.40
codegen_flags: <defaults>
</compile_context>

<pallas_src>
import functools

import numpy as np

import jax
import jax.numpy as jnp
from jax.experimental import pallas as pl
from jax.experimental.pallas import tpu as pltpu

D_NODE = 23              # node feature dim  (w1 is (1, 23))
D_EDGE = 3               # edge feature dim  (w2 is (1, 3))
D_TOT = D_NODE + D_EDGE  # fused feature dim = 26


# --------------------------------------------------------------------------- #
# Host-side packing (stands in for the numpy matrix assembly of the module).  #
# --------------------------------------------------------------------------- #
def pack_group_features(grp_node, grp_edge, *, group_block=None, num_splits=2,
                        block_budget_bytes=12 << 20):
    """Pack per-group node/edge feature matrices into the TPU-friendly fused layout.

    Returns (packed, meta) where packed is float32 (D_TOT, G_pad, N_pad) with
    groups on the sublane axis (G_pad multiple of 8*...) and nodes lane-padded
    to a multiple of 128.  Pure numpy / host side — no extra device pass.
    """
    gn = np.asarray(grp_node, dtype=np.float32)
    ge = np.asarray(grp_edge, dtype=np.float32)
    G, dn, N = gn.shape
    assert dn == D_NODE and ge.shape == (G, D_EDGE, N)

    n_pad = ((N + 127) // 128) * 128

    if group_block is None:
        per_group_bytes = D_TOT * n_pad * 4
        gb = int(block_budget_bytes // per_group_bytes)
        gb = max(8, min(512, (gb // 8) * 8))
        # do not make blocks larger than needed to give each split >=1 real block
        per_split = -(-G // max(1, num_splits))
        gb = min(gb, max(8, ((per_split + 7) // 8) * 8))
    else:
        gb = max(8, ((int(group_block) + 7) // 8) * 8)

    blocks = -(-G // gb)
    splits = max(1, min(int(num_splits), blocks))
    bps = -(-blocks // splits)
    g_pad = splits * bps * gb

    packed = np.zeros((D_TOT, g_pad, n_pad), dtype=np.float32)
    packed[:D_NODE, :G, :N] = np.transpose(gn, (1, 0, 2))
    packed[D_NODE:, :G, :N] = np.transpose(ge, (1, 0, 2))

    meta = dict(num_groups=G, num_nodes=N, group_block=gb,
                num_splits=splits, blocks_per_split=bps)
    return packed, meta


# --------------------------------------------------------------------------- #
# Streaming partition-function kernel: per-split online log-sum-exp of Z.      #
# --------------------------------------------------------------------------- #
def _partition_kernel(n_groups, w_ref, grp_ref, m_out_ref, z_out_ref, m_sc, z_sc):
    c = pl.program_id(0)          # split (parallel -> both TCs on v7x)
    g = pl.program_id(1)          # group block within the split (reduction)
    nb = pl.num_programs(1)
    gb = grp_ref.shape[1]

    @pl.when(g == 0)
    def _():
        m_sc[...] = jnp.full(m_sc.shape, -jnp.inf, jnp.float32)
        z_sc[...] = jnp.zeros_like(z_sc)

    # Per-group energy: s_g = sum_{k,n} w[k] * grp[k, g, n].
    # Weight-then-accumulate over the (untiled) feature axis on the VPU so the XLU
    # lane reduce only sees one (gb, n_pad) plane instead of 26.
    acc = grp_ref[0] * w_ref[0]
    for k in range(1, D_TOT):
        acc = acc + grp_ref[k] * w_ref[k]
    s = jnp.sum(acc, axis=1, keepdims=True)                     # (gb, 1) lane reduce

    # Mask zero-padded tail groups (padding added host-side).
    first_group = (c * nb + g) * gb
    gid = first_group + jax.lax.broadcasted_iota(jnp.int32, (gb, 1), 0)
    s = jnp.where(gid < n_groups, s, -jnp.inf)

    # Online log-sum-exp accumulation of this split's share of Z.
    m_old = m_sc[...]
    m_new = jnp.maximum(m_old, jnp.max(s))
    m_safe = jnp.maximum(m_new, -1e30)    # keeps exp() args finite if an entire
                                          # block / split happens to be padding
    z_sc[...] = z_sc[...] * jnp.exp(m_old - m_safe) + jnp.sum(jnp.exp(s - m_safe))
    m_sc[...] = m_new

    @pl.when(g == nb - 1)
    def _():
        m_out_ref[...] = jnp.broadcast_to(m_sc[...].reshape(1, 1, 1), m_out_ref.shape)
        z_out_ref[...] = jnp.broadcast_to(z_sc[...].reshape(1, 1, 1), z_out_ref.shape)


def _partition_partials(w_vec, grp_packed, meta):
    """Runs the streaming kernel; returns per-split (m, z) log-sum-exp partials."""
    d_tot, g_pad, n_pad = grp_packed.shape
    gb = meta["group_block"]
    splits = meta["num_splits"]
    bps = meta["blocks_per_split"]
    n_groups = meta["num_groups"]
    assert d_tot == D_TOT and g_pad == splits * bps * gb and n_pad % 128 == 0

    block_bytes = D_TOT * gb * n_pad * 4
    vmem_limit = int(min(max(2 * block_bytes + (4 << 20), 16 << 20), 44 << 20))

    cost = pl.CostEstimate(
        flops=3 * D_TOT * g_pad * n_pad,
        transcendentals=g_pad + 2 * splits * bps,
        bytes_accessed=grp_packed.size * 4 + D_TOT * 4 + 2 * splits * 128 * 4,
    )

    m_parts, z_parts = pl.pallas_call(
        functools.partial(_partition_kernel, n_groups),
        out_shape=(jax.ShapeDtypeStruct((splits, 1, 128), jnp.float32),
                   jax.ShapeDtypeStruct((splits, 1, 128), jnp.float32)),
        grid_spec=pltpu.PrefetchScalarGridSpec(
            num_scalar_prefetch=0,
            grid=(splits, bps),
            in_specs=[
                # fused (26,) weight vector -> SMEM scalars (used as VPU multipliers)
                pl.BlockSpec(memory_space=pltpu.MemorySpace.SMEM),
                # one block of gb groups, groups on the sublane axis (gb % 8 == 0)
                pl.BlockSpec((D_TOT, gb, n_pad), lambda c, g: (0, c * bps + g, 0)),
            ],
            out_specs=[
                pl.BlockSpec((1, 1, 128), lambda c, g: (c, 0, 0)),
                pl.BlockSpec((1, 1, 128), lambda c, g: (c, 0, 0)),
            ],
            scratch_shapes=[pltpu.VMEM((1, 1), jnp.float32),   # running max m
                            pltpu.VMEM((1, 1), jnp.float32)],  # running scaled sum z
        ),
        compiler_params=pltpu.CompilerParams(
            dimension_semantics=("parallel", "arbitrary"),
            vmem_limit_bytes=vmem_limit),
        cost_estimate=cost,
    )(w_vec, grp_packed)

    return m_parts[:, 0, 0], z_parts[:, 0, 0]


# --------------------------------------------------------------------------- #
# Forward pass wrapper.                                                        #
# --------------------------------------------------------------------------- #
def negative_log_prob(w1, w2, pot_node, pot_edge, grp_packed, meta):
    """w1:(1,23) w2:(1,3) pot_node:(23,N) pot_edge:(3,N)
       grp_packed/meta: output of pack_group_features  ->  (1, N) negativeProb."""
    f32 = jnp.float32
    n = meta["num_nodes"]
    assert pot_node.shape == (D_NODE, n)
    assert pot_edge.shape[0] == D_EDGE and pot_edge.shape[1] == n, \
        "PyTorch broadcast add requires #nodes == #edges"

    w_vec = jnp.concatenate(
        [jnp.reshape(w1, (-1,)), jnp.reshape(w2, (-1,))]).astype(f32)   # (26,)
    grp_dev = jnp.asarray(grp_packed, f32)

    # --- partition function log(Z): streaming Pallas kernel + tiny combine ---
    m_parts, z_parts = _partition_partials(w_vec, grp_dev, meta)
    m_max = jnp.max(m_parts)
    z_sum = jnp.sum(z_parts * jnp.exp(m_parts - m_max))
    log_z = m_max + jnp.log(z_sum)

    # --- potential term: tiny (1,26)@(26,N) GEMV, hoisted out of the kernel ---
    potential = (jnp.dot(w1.astype(f32), pot_node.astype(f32)) +
                 jnp.dot(w2.astype(f32), pot_edge.astype(f32)))         # (1, N)

    return log_z - potential


def _reference(w1, w2, pot_node, pot_edge, grp_node, grp_edge):
    potential = w1 @ pot_node + w2 @ pot_edge                           # (1, N)
    part1 = jnp.einsum("ik,gkn->g", w1, grp_node)
    part2 = jnp.einsum("ik,gkn->g", w2, grp_edge)
    z = jnp.sum(jnp.exp(part1 + part2))
    return jnp.log(z) - potential


if __name__ == "__main__":
    key = jax.random.PRNGKey(0)
    k1, k2, k3, k4, k5, k6 = jax.random.split(key, 6)

    # small synthetic graph: N nodes == E edges (required by the torch broadcast), G groups
    N = 8
    G = 20

    # parameters: torch.rand -> uniform [0, 1)
    w1 = jax.random.uniform(k1, (1, D_NODE), dtype=jnp.float32)
    w2 = jax.random.uniform(k2, (1, D_EDGE), dtype=jnp.float32)

    # matrices that _makeMatrixForPotential / _makeMatrixForPartition would build
    pot_node = jax.random.uniform(k3, (D_NODE, N), dtype=jnp.float32) * 0.1
    pot_edge = jax.random.uniform(k4, (D_EDGE, N), dtype=jnp.float32) * 0.1
    grp_node = jax.random.uniform(k5, (G, D_NODE, N), dtype=jnp.float32) * 0.1
    grp_edge = jax.random.uniform(k6, (G, D_EDGE, N), dtype=jnp.float32) * 0.1

    # Host-side packing (this is the stage where MyModel builds matrices from the
    # graph / dicts).  group_block=8, num_splits=2 exercises: multi-block streaming
    # per split, the parallel split axis, and tail-group masking (G=20 -> G_pad=32).
    grp_packed, meta = pack_group_features(np.asarray(grp_node), np.asarray(grp_edge),
                                           group_block=8, num_splits=2)

    out = negative_log_prob(w1, w2, pot_node, pot_edge, grp_packed, meta)
    out = jax.block_until_ready(out)

    ref = _reference(w1, w2, pot_node, pot_edge, grp_node, grp_edge)
    assert out.shape == (1, N)
    assert jnp.allclose(out, ref, rtol=1e-5, atol=1e-4), (out, ref)

    print("KERNEL_OK")
</pallas_src>

<mosaic_0001>
module attributes {stable_mosaic.version = 11 : i64} {
  func.func @_partition_kernel(%arg0: i32, %arg1: i32, %arg2: memref<26xf32, #tpu.memory_space<smem>>, %arg3: memref<26x8x128xf32, #tpu.memory_space<vmem>>, %arg4: memref<1x1x128xf32, #tpu.memory_space<vmem>>, %arg5: memref<1x1x128xf32, #tpu.memory_space<vmem>>, %arg6: memref<1x1xf32, #tpu.memory_space<vmem>>, %arg7: memref<1x1xf32, #tpu.memory_space<vmem>>) attributes {dimension_semantics = [#tpu.dimension_semantics<parallel>, #tpu.dimension_semantics<arbitrary>], iteration_bounds = array<i64: 2, 2>, scalar_prefetch = 0 : i64, scratch_operands = 2 : i64, tpu.core_type = #tpu.core_type<tc>, window_params = [{transform_indices = @transform_0, window_bounds = array<i64: 26>}, {transform_indices = @transform_1, window_bounds = array<i64: 26, 8, 128>}, {transform_indices = @transform_2, window_bounds = array<i64: 1, 1, 128>}, {transform_indices = @transform_3, window_bounds = array<i64: 1, 1, 128>}]} {
    %c0_i32 = arith.constant 0 : i32
    %0 = arith.cmpi eq, %arg1, %c0_i32 : i32
    %1 = arith.extui %0 : i1 to i32
    %c0_i32_0 = arith.constant 0 : i32
    %2 = arith.cmpi ne, %1, %c0_i32_0 : i32
    scf.if %2 {
      %cst_92 = arith.constant 0xFF800000 : f32
      %197 = vector.broadcast %cst_92 : f32 to vector<1x1xf32>
      %c0_93 = arith.constant 0 : index
      %c0_94 = arith.constant 0 : index
      %198 = vector.load %arg6[%c0_93, %c0_94] : memref<1x1xf32, #tpu.memory_space<vmem>>, vector<1x1xf32>
      tpu.vector_store %arg6[%c0_93, %c0_94], %197 {strides = array<i32>} : memref<1x1xf32, #tpu.memory_space<vmem>>, vector<1x1xf32>,
      %cst_95 = arith.constant 0.000000e+00 : f32
      %199 = vector.broadcast %cst_95 : f32 to vector<1x1xf32>
      %c0_96 = arith.constant 0 : index
      %c0_97 = arith.constant 0 : index
      %200 = vector.load %arg7[%c0_96, %c0_97] : memref<1x1xf32, #tpu.memory_space<vmem>>, vector<1x1xf32>
      tpu.vector_store %arg7[%c0_96, %c0_97], %199 {strides = array<i32>} : memref<1x1xf32, #tpu.memory_space<vmem>>, vector<1x1xf32>,
    } else {
    }
    %c0 = arith.constant 0 : index
    %c0_1 = arith.constant 0 : index
    %c0_2 = arith.constant 0 : index
    %3 = vector.load %arg3[%c0, %c0_1, %c0_2] : memref<26x8x128xf32, #tpu.memory_space<vmem>>, vector<1x8x128xf32>
    %4 = vector.shape_cast %3 : vector<1x8x128xf32> to vector<8x128xf32>
    %c0_3 = arith.constant 0 : index
    %5 = memref.load %arg2[%c0_3] : memref<26xf32, #tpu.memory_space<smem>>
    %6 = vector.broadcast %5 : f32 to vector<8x128xf32>
    %7 = arith.mulf %4, %6 : vector<8x128xf32>
    %c1 = arith.constant 1 : index
    %c0_4 = arith.constant 0 : index
    %c0_5 = arith.constant 0 : index
    %8 = vector.load %arg3[%c1, %c0_4, %c0_5] : memref<26x8x128xf32, #tpu.memory_space<vmem>>, vector<1x8x128xf32>
    %9 = vector.shape_cast %8 : vector<1x8x128xf32> to vector<8x128xf32>
    %c1_6 = arith.constant 1 : index
    %10 = memref.load %arg2[%c1_6] : memref<26xf32, #tpu.memory_space<smem>>
    %11 = vector.broadcast %10 : f32 to vector<8x128xf32>
    %12 = arith.mulf %9, %11 : vector<8x128xf32>
    %13 = arith.addf %7, %12 : vector<8x128xf32>
    %c2 = arith.constant 2 : index
    %c0_7 = arith.constant 0 : index
    %c0_8 = arith.constant 0 : index
    %14 = vector.load %arg3[%c2, %c0_7, %c0_8] : memref<26x8x128xf32, #tpu.memory_space<vmem>>, vector<1x8x128xf32>
    %15 = vector.shape_cast %14 : vector<1x8x128xf32> to vector<8x128xf32>
    %c2_9 = arith.constant 2 : index
    %16 = memref.load %arg2[%c2_9] : memref<26xf32, #tpu.memory_space<smem>>
    %17 = vector.broadcast %16 : f32 to vector<8x128xf32>
    %18 = arith.mulf %15, %17 : vector<8x128xf32>
    %19 = arith.addf %13, %18 : vector<8x128xf32>
    %c3 = arith.constant 3 : index
    %c0_10 = arith.constant 0 : index
    %c0_11 = arith.constant 0 : index
    %20 = vector.load %arg3[%c3, %c0_10, %c0_11] : memref<26x8x128xf32, #tpu.memory_space<vmem>>, vector<1x8x128xf32>
    %21 = vector.shape_cast %20 : vector<1x8x128xf32> to vector<8x128xf32>
    %c3_12 = arith.constant 3 : index
    %22 = memref.load %arg2[%c3_12] : memref<26xf32, #tpu.memory_space<smem>>
    %23 = vector.broadcast %22 : f32 to vector<8x128xf32>
    %24 = arith.mulf %21, %23 : vector<8x128xf32>
    %25 = arith.addf %19, %24 : vector<8x128xf32>
    %c4 = arith.constant 4 : index
    %c0_13 = arith.constant 0 : index
    %c0_14 = arith.constant 0 : index
    %26 = vector.load %arg3[%c4, %c0_13, %c0_14] : memref<26x8x128xf32, #tpu.memory_space<vmem>>, vector<1x8x128xf32>
    %27 = vector.shape_cast %26 : vector<1x8x128xf32> to vector<8x128xf32>
    %c4_15 = arith.constant 4 : index
    %28 = memref.load %arg2[%c4_15] : memref<26xf32, #tpu.memory_space<smem>>
    %29 = vector.broadcast %28 : f32 to vector<8x128xf32>
    %30 = arith.mulf %27, %29 : vector<8x128xf32>
    %31 = arith.addf %25, %30 : vector<8x128xf32>
    %c5 = arith.constant 5 : index
    %c0_16 = arith.constant 0 : index
    %c0_17 = arith.constant 0 : index
    %32 = vector.load %arg3[%c5, %c0_16, %c0_17] : memref<26x8x128xf32, #tpu.memory_space<vmem>>, vector<1x8x128xf32>
    %33 = vector.shape_cast %32 : vector<1x8x128xf32> to vector<8x128xf32>
    %c5_18 = arith.constant 5 : index
    %34 = memref.load %arg2[%c5_18] : memref<26xf32, #tpu.memory_space<smem>>
    %35 = vector.broadcast %34 : f32 to vector<8x128xf32>
    %36 = arith.mulf %33, %35 : vector<8x128xf32>
    %37 = arith.addf %31, %36 : vector<8x128xf32>
    %c6 = arith.constant 6 : index
    %c0_19 = arith.constant 0 : index
    %c0_20 = arith.constant 0 : index
    %38 = vector.load %arg3[%c6, %c0_19, %c0_20] : memref<26x8x128xf32, #tpu.memory_space<vmem>>, vector<1x8x128xf32>
    %39 = vector.shape_cast %38 : vector<1x8x128xf32> to vector<8x128xf32>
    %c6_21 = arith.constant 6 : index
    %40 = memref.load %arg2[%c6_21] : memref<26xf32, #tpu.memory_space<smem>>
    %41 = vector.broadcast %40 : f32 to vector<8x128xf32>
    %42 = arith.mulf %39, %41 : vector<8x128xf32>
    %43 = arith.addf %37, %42 : vector<8x128xf32>
    %c7 = arith.constant 7 : index
    %c0_22 = arith.constant 0 : index
    %c0_23 = arith.constant 0 : index
    %44 = vector.load %arg3[%c7, %c0_22, %c0_23] : memref<26x8x128xf32, #tpu.memory_space<vmem>>, vector<1x8x128xf32>
    %45 = vector.shape_cast %44 : vector<1x8x128xf32> to vector<8x128xf32>
    %c7_24 = arith.constant 7 : index
    %46 = memref.load %arg2[%c7_24] : memref<26xf32, #tpu.memory_space<smem>>
    %47 = vector.broadcast %46 : f32 to vector<8x128xf32>
    %48 = arith.mulf %45, %47 : vector<8x128xf32>
    %49 = arith.addf %43, %48 : vector<8x128xf32>
    %c8 = arith.constant 8 : index
    %c0_25 = arith.constant 0 : index
    %c0_26 = arith.constant 0 : index
    %50 = vector.load %arg3[%c8, %c0_25, %c0_26] : memref<26x8x128xf32, #tpu.memory_space<vmem>>, vector<1x8x128xf32>
    %51 = vector.shape_cast %50 : vector<1x8x128xf32> to vector<8x128xf32>
    %c8_27 = arith.constant 8 : index
    %52 = memref.load %arg2[%c8_27] : memref<26xf32, #tpu.memory_space<smem>>
    %53 = vector.broadcast %52 : f32 to vector<8x128xf32>
    %54 = arith.mulf %51, %53 : vector<8x128xf32>
    %55 = arith.addf %49, %54 : vector<8x128xf32>
    %c9 = arith.constant 9 : index
    %c0_28 = arith.constant 0 : index
    %c0_29 = arith.constant 0 : index
    %56 = vector.load %arg3[%c9, %c0_28, %c0_29] : memref<26x8x128xf32, #tpu.memory_space<vmem>>, vector<1x8x128xf32>
    %57 = vector.shape_cast %56 : vector<1x8x128xf32> to vector<8x128xf32>
    %c9_30 = arith.constant 9 : index
    %58 = memref.load %arg2[%c9_30] : memref<26xf32, #tpu.memory_space<smem>>
    %59 = vector.broadcast %58 : f32 to vector<8x128xf32>
    %60 = arith.mulf %57, %59 : vector<8x128xf32>
    %61 = arith.addf %55, %60 : vector<8x128xf32>
    %c10 = arith.constant 10 : index
    %c0_31 = arith.constant 0 : index
    %c0_32 = arith.constant 0 : index
    %62 = vector.load %arg3[%c10, %c0_31, %c0_32] : memref<26x8x128xf32, #tpu.memory_space<vmem>>, vector<1x8x128xf32>
    %63 = vector.shape_cast %62 : vector<1x8x128xf32> to vector<8x128xf32>
    %c10_33 = arith.constant 10 : index
    %64 = memref.load %arg2[%c10_33] : memref<26xf32, #tpu.memory_space<smem>>
    %65 = vector.broadcast %64 : f32 to vector<8x128xf32>
    %66 = arith.mulf %63, %65 : vector<8x128xf32>
    %67 = arith.addf %61, %66 : vector<8x128xf32>
    %c11 = arith.constant 11 : index
    %c0_34 = arith.constant 0 : index
    %c0_35 = arith.constant 0 : index
    %68 = vector.load %arg3[%c11, %c0_34, %c0_35] : memref<26x8x128xf32, #tpu.memory_space<vmem>>, vector<1x8x128xf32>
    %69 = vector.shape_cast %68 : vector<1x8x128xf32> to vector<8x128xf32>
    %c11_36 = arith.constant 11 : index
    %70 = memref.load %arg2[%c11_36] : memref<26xf32, #tpu.memory_space<smem>>
    %71 = vector.broadcast %70 : f32 to vector<8x128xf32>
    %72 = arith.mulf %69, %71 : vector<8x128xf32>
    %73 = arith.addf %67, %72 : vector<8x128xf32>
    %c12 = arith.constant 12 : index
    %c0_37 = arith.constant 0 : index
    %c0_38 = arith.constant 0 : index
    %74 = vector.load %arg3[%c12, %c0_37, %c0_38] : memref<26x8x128xf32, #tpu.memory_space<vmem>>, vector<1x8x128xf32>
    %75 = vector.shape_cast %74 : vector<1x8x128xf32> to vector<8x128xf32>
    %c12_39 = arith.constant 12 : index
    %76 = memref.load %arg2[%c12_39] : memref<26xf32, #tpu.memory_space<smem>>
    %77 = vector.broadcast %76 : f32 to vector<8x128xf32>
    %78 = arith.mulf %75, %77 : vector<8x128xf32>
    %79 = arith.addf %73, %78 : vector<8x128xf32>
    %c13 = arith.constant 13 : index
    %c0_40 = arith.constant 0 : index
    %c0_41 = arith.constant 0 : index
    %80 = vector.load %arg3[%c13, %c0_40, %c0_41] : memref<26x8x128xf32, #tpu.memory_space<vmem>>, vector<1x8x128xf32>
    %81 = vector.shape_cast %80 : vector<1x8x128xf32> to vector<8x128xf32>
    %c13_42 = arith.constant 13 : index
    %82 = memref.load %arg2[%c13_42] : memref<26xf32, #tpu.memory_space<smem>>
    %83 = vector.broadcast %82 : f32 to vector<8x128xf32>
    %84 = arith.mulf %81, %83 : vector<8x128xf32>
    %85 = arith.addf %79, %84 : vector<8x128xf32>
    %c14 = arith.constant 14 : index
    %c0_43 = arith.constant 0 : index
    %c0_44 = arith.constant 0 : index
    %86 = vector.load %arg3[%c14, %c0_43, %c0_44] : memref<26x8x128xf32, #tpu.memory_space<vmem>>, vector<1x8x128xf32>
    %87 = vector.shape_cast %86 : vector<1x8x128xf32> to vector<8x128xf32>
    %c14_45 = arith.constant 14 : index
    %88 = memref.load %arg2[%c14_45] : memref<26xf32, #tpu.memory_space<smem>>
    %89 = vector.broadcast %88 : f32 to vector<8x128xf32>
    %90 = arith.mulf %87, %89 : vector<8x128xf32>
    %91 = arith.addf %85, %90 : vector<8x128xf32>
    %c15 = arith.constant 15 : index
    %c0_46 = arith.constant 0 : index
    %c0_47 = arith.constant 0 : index
    %92 = vector.load %arg3[%c15, %c0_46, %c0_47] : memref<26x8x128xf32, #tpu.memory_space<vmem>>, vector<1x8x128xf32>
    %93 = vector.shape_cast %92 : vector<1x8x128xf32> to vector<8x128xf32>
    %c15_48 = arith.constant 15 : index
    %94 = memref.load %arg2[%c15_48] : memref<26xf32, #tpu.memory_space<smem>>
    %95 = vector.broadcast %94 : f32 to vector<8x128xf32>
    %96 = arith.mulf %93, %95 : vector<8x128xf32>
    %97 = arith.addf %91, %96 : vector<8x128xf32>
    %c16 = arith.constant 16 : index
    %c0_49 = arith.constant 0 : index
    %c0_50 = arith.constant 0 : index
    %98 = vector.load %arg3[%c16, %c0_49, %c0_50] : memref<26x8x128xf32, #tpu.memory_space<vmem>>, vector<1x8x128xf32>
    %99 = vector.shape_cast %98 : vector<1x8x128xf32> to vector<8x128xf32>
    %c16_51 = arith.constant 16 : index
    %100 = memref.load %arg2[%c16_51] : memref<26xf32, #tpu.memory_space<smem>>
    %101 = vector.broadcast %100 : f32 to vector<8x128xf32>
    %102 = arith.mulf %99, %101 : vector<8x128xf32>
    %103 = arith.addf %97, %102 : vector<8x128xf32>
    %c17 = arith.constant 17 : index
    %c0_52 = arith.constant 0 : index
    %c0_53 = arith.constant 0 : index
    %104 = vector.load %arg3[%c17, %c0_52, %c0_53] : memref<26x8x128xf32, #tpu.memory_space<vmem>>, vector<1x8x128xf32>
    %105 = vector.shape_cast %104 : vector<1x8x128xf32> to vector<8x128xf32>
    %c17_54 = arith.constant 17 : index
    %106 = memref.load %arg2[%c17_54] : memref<26xf32, #tpu.memory_space<smem>>
    %107 = vector.broadcast %106 : f32 to vector<8x128xf32>
    %108 = arith.mulf %105, %107 : vector<8x128xf32>
    %109 = arith.addf %103, %108 : vector<8x128xf32>
    %c18 = arith.constant 18 : index
    %c0_55 = arith.constant 0 : index
    %c0_56 = arith.constant 0 : index
    %110 = vector.load %arg3[%c18, %c0_55, %c0_56] : memref<26x8x128xf32, #tpu.memory_space<vmem>>, vector<1x8x128xf32>
    %111 = vector.shape_cast %110 : vector<1x8x128xf32> to vector<8x128xf32>
    %c18_57 = arith.constant 18 : index
    %112 = memref.load %arg2[%c18_57] : memref<26xf32, #tpu.memory_space<smem>>
    %113 = vector.broadcast %112 : f32 to vector<8x128xf32>
    %114 = arith.mulf %111, %113 : vector<8x128xf32>
    %115 = arith.addf %109, %114 : vector<8x128xf32>
    %c19 = arith.constant 19 : index
    %c0_58 = arith.constant 0 : index
    %c0_59 = arith.constant 0 : index
    %116 = vector.load %arg3[%c19, %c0_58, %c0_59] : memref<26x8x128xf32, #tpu.memory_space<vmem>>, vector<1x8x128xf32>
    %117 = vector.shape_cast %116 : vector<1x8x128xf32> to vector<8x128xf32>
    %c19_60 = arith.constant 19 : index
    %118 = memref.load %arg2[%c19_60] : memref<26xf32, #tpu.memory_space<smem>>
    %119 = vector.broadcast %118 : f32 to vector<8x128xf32>
    %120 = arith.mulf %117, %119 : vector<8x128xf32>
    %121 = arith.addf %115, %120 : vector<8x128xf32>
    %c20 = arith.constant 20 : index
    %c0_61 = arith.constant 0 : index
    %c0_62 = arith.constant 0 : index
    %122 = vector.load %arg3[%c20, %c0_61, %c0_62] : memref<26x8x128xf32, #tpu.memory_space<vmem>>, vector<1x8x128xf32>
    %123 = vector.shape_cast %122 : vector<1x8x128xf32> to vector<8x128xf32>
    %c20_63 = arith.constant 20 : index
    %124 = memref.load %arg2[%c20_63] : memref<26xf32, #tpu.memory_space<smem>>
    %125 = vector.broadcast %124 : f32 to vector<8x128xf32>
    %126 = arith.mulf %123, %125 : vector<8x128xf32>
    %127 = arith.addf %121, %126 : vector<8x128xf32>
    %c21 = arith.constant 21 : index
    %c0_64 = arith.constant 0 : index
    %c0_65 = arith.constant 0 : index
    %128 = vector.load %arg3[%c21, %c0_64, %c0_65] : memref<26x8x128xf32, #tpu.memory_space<vmem>>, vector<1x8x128xf32>
    %129 = vector.shape_cast %128 : vector<1x8x128xf32> to vector<8x128xf32>
    %c21_66 = arith.constant 21 : index
    %130 = memref.load %arg2[%c21_66] : memref<26xf32, #tpu.memory_space<smem>>
    %131 = vector.broadcast %130 : f32 to vector<8x128xf32>
    %132 = arith.mulf %129, %131 : vector<8x128xf32>
    %133 = arith.addf %127, %132 : vector<8x128xf32>
    %c22 = arith.constant 22 : index
    %c0_67 = arith.constant 0 : index
    %c0_68 = arith.constant 0 : index
    %134 = vector.load %arg3[%c22, %c0_67, %c0_68] : memref<26x8x128xf32, #tpu.memory_space<vmem>>, vector<1x8x128xf32>
    %135 = vector.shape_cast %134 : vector<1x8x128xf32> to vector<8x128xf32>
    %c22_69 = arith.constant 22 : index
    %136 = memref.load %arg2[%c22_69] : memref<26xf32, #tpu.memory_space<smem>>
    %137 = vector.broadcast %136 : f32 to vector<8x128xf32>
    %138 = arith.mulf %135, %137 : vector<8x128xf32>
    %139 = arith.addf %133, %138 : vector<8x128xf32>
    %c23 = arith.constant 23 : index
    %c0_70 = arith.constant 0 : index
    %c0_71 = arith.constant 0 : index
    %140 = vector.load %arg3[%c23, %c0_70, %c0_71] : memref<26x8x128xf32, #tpu.memory_space<vmem>>, vector<1x8x128xf32>
    %141 = vector.shape_cast %140 : vector<1x8x128xf32> to vector<8x128xf32>
    %c23_72 = arith.constant 23 : index
    %142 = memref.load %arg2[%c23_72] : memref<26xf32, #tpu.memory_space<smem>>
    %143 = vector.broadcast %142 : f32 to vector<8x128xf32>
    %144 = arith.mulf %141, %143 : vector<8x128xf32>
    %145 = arith.addf %139, %144 : vector<8x128xf32>
    %c24 = arith.constant 24 : index
    %c0_73 = arith.constant 0 : index
    %c0_74 = arith.constant 0 : index
    %146 = vector.load %arg3[%c24, %c0_73, %c0_74] : memref<26x8x128xf32, #tpu.memory_space<vmem>>, vector<1x8x128xf32>
    %147 = vector.shape_cast %146 : vector<1x8x128xf32> to vector<8x128xf32>
    %c24_75 = arith.constant 24 : index
    %148 = memref.load %arg2[%c24_75] : memref<26xf32, #tpu.memory_space<smem>>
    %149 = vector.broadcast %148 : f32 to vector<8x128xf32>
    %150 = arith.mulf %147, %149 : vector<8x128xf32>
    %151 = arith.addf %145, %150 : vector<8x128xf32>
    %c25 = arith.constant 25 : index
    %c0_76 = arith.constant 0 : index
    %c0_77 = arith.constant 0 : index
    %152 = vector.load %arg3[%c25, %c0_76, %c0_77] : memref<26x8x128xf32, #tpu.memory_space<vmem>>, vector<1x8x128xf32>
    %153 = vector.shape_cast %152 : vector<1x8x128xf32> to vector<8x128xf32>
    %c25_78 = arith.constant 25 : index
    %154 = memref.load %arg2[%c25_78] : memref<26xf32, #tpu.memory_space<smem>>
    %155 = vector.broadcast %154 : f32 to vector<8x128xf32>
    %156 = arith.mulf %153, %155 : vector<8x128xf32>
    %157 = arith.addf %151, %156 : vector<8x128xf32>
    %cst = arith.constant dense<0.000000e+00> : vector<8xf32>
    %158 = vector.multi_reduction <add>, %157, %cst [1] : vector<8x128xf32> to vector<8xf32>
    %159 = vector.shape_cast %158 : vector<8xf32> to vector<8x1xf32>
    %c2_i32 = arith.constant 2 : i32
    %160 = arith.muli %arg0, %c2_i32 : i32
    %161 = arith.addi %160, %arg1 : i32
    %c8_i32 = arith.constant 8 : i32
    %162 = arith.muli %161, %c8_i32 : i32
    %163 = tpu.iota {dimensions = array<i32: 0>} : vector<8x1xi32>
    %164 = vector.broadcast %162 : i32 to vector<8x1xi32>
    %165 = arith.addi %164, %163 : vector<8x1xi32>
    %c20_i32 = arith.constant 20 : i32
    %166 = vector.broadcast %c20_i32 : i32 to vector<8x1xi32>
    %167 = arith.cmpi slt, %165, %166 : vector<8x1xi32>
    %cst_79 = arith.constant 0xFF800000 : f32
    %168 = vector.broadcast %cst_79 : f32 to vector<8x1xf32>
    %169 = arith.select %167, %159, %168 : vector<8x1xi1>, vector<8x1xf32>
    %c0_80 = arith.constant 0 : index
    %c0_81 = arith.constant 0 : index
    %170 = vector.load %arg6[%c0_80, %c0_81] : memref<1x1xf32, #tpu.memory_space<vmem>>, vector<1x1xf32>
    %171 = vector.shape_cast %169 : vector<8x1xf32> to vector<1x8x1xf32>
    %cst_82 = arith.constant dense<0xFF800000> : vector<1xf32>
    %172 = vector.multi_reduction <maximumf>, %171, %cst_82 [1, 2] : vector<1x8x1xf32> to vector<1xf32>
    %173 = vector.shape_cast %172 : vector<1xf32> to vector<1x1x1xf32>
    %174 = vector.extract %173[0, 0, 0] : f32 from vector<1x1x1xf32>
    %175 = vector.broadcast %174 : f32 to vector<1x1xf32>
    %176 = arith.maximumf %170, %175 : vector<1x1xf32>
    %cst_83 = arith.constant -1.000000e+30 : f32
    %177 = vector.broadcast %cst_83 : f32 to vector<1x1xf32>
    %178 = arith.maximumf %176, %177 : vector<1x1xf32>
    %c0_84 = arith.constant 0 : index
    %c0_85 = arith.constant 0 : index
    %179 = vector.load %arg7[%c0_84, %c0_85] : memref<1x1xf32, #tpu.memory_space<vmem>>, vector<1x1xf32>
    %180 = arith.subf %170, %178 : vector<1x1xf32>
    %181 = math.exp %180 : vector<1x1xf32>
    %182 = arith.mulf %179, %181 : vector<1x1xf32>
    %183 = vector.broadcast %178 : vector<1x1xf32> to vector<8x1xf32>
    %184 = arith.subf %169, %183 : vector<8x1xf32>
    %185 = math.exp %184 : vector<8x1xf32>
    %186 = vector.shape_cast %185 : vector<8x1xf32> to vector<1x8x1xf32>
    %cst_86 = arith.constant dense<0.000000e+00> : vector<1xf32>
    %187 = vector.multi_reduction <add>, %186, %cst_86 [1, 2] : vector<1x8x1xf32> to vector<1xf32>
    %188 = vector.shape_cast %187 : vector<1xf32> to vector<1x1x1xf32>
    %189 = vector.extract %188[0, 0, 0] : f32 from vector<1x1x1xf32>
    %190 = vector.broadcast %189 : f32 to vector<1x1xf32>
    %191 = arith.addf %182, %190 : vector<1x1xf32>
    %c0_87 = arith.constant 0 : index
    %c0_88 = arith.constant 0 : index
    %192 = vector.load %arg7[%c0_87, %c0_88] : memref<1x1xf32, #tpu.memory_space<vmem>>, vector<1x1xf32>
    tpu.vector_store %arg7[%c0_87, %c0_88], %191 {strides = array<i32>} : memref<1x1xf32, #tpu.memory_space<vmem>>, vector<1x1xf32>,
    %c0_89 = arith.constant 0 : index
    %c0_90 = arith.constant 0 : index
    %193 = vector.load %arg6[%c0_89, %c0_90] : memref<1x1xf32, #tpu.memory_space<vmem>>, vector<1x1xf32>
    tpu.vector_store %arg6[%c0_89, %c0_90], %176 {strides = array<i32>} : memref<1x1xf32, #tpu.memory_space<vmem>>, vector<1x1xf32>,
    %c1_i32 = arith.constant 1 : i32
    %194 = arith.cmpi eq, %arg1, %c1_i32 : i32
    %195 = arith.extui %194 : i1 to i32
    %c0_i32_91 = arith.constant 0 : i32
    %196 = arith.cmpi ne, %195, %c0_i32_91 : i32
    scf.if %196 {
      %c0_92 = arith.constant 0 : index
      %c0_93 = arith.constant 0 : index
      %197 = vector.load %arg6[%c0_92, %c0_93] : memref<1x1xf32, #tpu.memory_space<vmem>>, vector<1x1xf32>
      %198 = vector.shape_cast %197 : vector<1x1xf32> to vector<1x1x1xf32>
      %199 = vector.shape_cast %198 : vector<1x1x1xf32> to vector<1x1x1xf32>
      %200 = vector.broadcast %199 : vector<1x1x1xf32> to vector<1x1x128xf32>
      %c0_94 = arith.constant 0 : index
      %c0_95 = arith.constant 0 : index
      %c0_96 = arith.constant 0 : index
      %201 = vector.load %arg4[%c0_94, %c0_95, %c0_96] : memref<1x1x128xf32, #tpu.memory_space<vmem>>, vector<1x1x128xf32>
      tpu.vector_store %arg4[%c0_94, %c0_95, %c0_96], %200 {strides = array<i32>} : memref<1x1x128xf32, #tpu.memory_space<vmem>>, vector<1x1x128xf32>,
      %c0_97 = arith.constant 0 : index
      %c0_98 = arith.constant 0 : index
      %202 = vector.load %arg7[%c0_97, %c0_98] : memref<1x1xf32, #tpu.memory_space<vmem>>, vector<1x1xf32>
      %203 = vector.shape_cast %202 : vector<1x1xf32> to vector<1x1x1xf32>
      %204 = vector.shape_cast %203 : vector<1x1x1xf32> to vector<1x1x1xf32>
      %205 = vector.broadcast %204 : vector<1x1x1xf32> to vector<1x1x128xf32>
      %c0_99 = arith.constant 0 : index
      %c0_100 = arith.constant 0 : index
      %c0_101 = arith.constant 0 : index
      %206 = vector.load %arg5[%c0_99, %c0_100, %c0_101] : memref<1x1x128xf32, #tpu.memory_space<vmem>>, vector<1x1x128xf32>
      tpu.vector_store %arg5[%c0_99, %c0_100, %c0_101], %205 {strides = array<i32>} : memref<1x1x128xf32, #tpu.memory_space<vmem>>, vector<1x1x128xf32>,
    } else {
    }
    return
  }
  func.func @transform_0(%arg0: i32, %arg1: i32) -> i32 {
    %c0_i32 = arith.constant 0 : i32
    %c0_i32_0 = arith.constant 0 : i32
    return %c0_i32 : i32
  }
  func.func @transform_1(%arg0: i32, %arg1: i32) -> (i32, i32, i32) {
    %c2_i32 = arith.constant 2 : i32
    %0 = arith.muli %arg0, %c2_i32 : i32
    %1 = arith.addi %0, %arg1 : i32
    %c0_i32 = arith.constant 0 : i32
    %c0_i32_0 = arith.constant 0 : i32
    %c0_i32_1 = arith.constant 0 : i32
    return %c0_i32, %1, %c0_i32_0 : i32, i32, i32
  }
  func.func @transform_2(%arg0: i32, %arg1: i32) -> (i32, i32, i32) {
    %c0_i32 = arith.constant 0 : i32
    %c0_i32_0 = arith.constant 0 : i32
    %c0_i32_1 = arith.constant 0 : i32
    return %arg0, %c0_i32, %c0_i32_0 : i32, i32, i32
  }
  func.func @transform_3(%arg0: i32, %arg1: i32) -> (i32, i32, i32) {
    %c0_i32 = arith.constant 0 : i32
    %c0_i32_0 = arith.constant 0 : i32
    %c0_i32_1 = arith.constant 0 : i32
    return %arg0, %c0_i32, %c0_i32_0 : i32, i32, i32
  }
}

</mosaic_0001>

<llo_original>
// kernel: tpu_custom_call.1
$region0: #{tpu_custom_call.1}
  #allocation0 [shape = 'u32[]', space=smem, size = 0x4, offset = 0x4, fixed_abs, tag = 'smem constant byte address 0x4 - core index']
  #allocation1 [shape = 'u32[144,128]{1,0:T(1,128)}', space=vmem, size = 0x12000, scoped, tag = 'internal scratch']
  #allocation2 [shape = 'f32[1,1]{1,0:T(1,128)}', space=vmem, size = 0x200, scoped, tag = 'scratch operand']
  #allocation3 [shape = 'f32[1,1]{1,0:T(1,128)}', space=vmem, size = 0x200, scoped, tag = 'scratch operand']
  %s0 = inlined_call_operand.hbm [shape: f32[26], index: 0, kind: input, shape index: {}]
  %s1 = inlined_call_operand.hbm [shape: f32[26,32,128], index: 1, kind: input, shape index: {}]
  %s2 = inlined_call_operand.hbm [shape: f32[2,1,128], index: 2, kind: output, shape index: {0}]
  %s3 = inlined_call_operand.hbm [shape: f32[2,1,128], index: 3, kind: output, shape index: {1}]
  %4 = xla_tuple %s2, %s3
  %s5 = sld [smem:[#allocation0]]
  $region65: #{tpu_custom_call.1} parent=0
    _
  %s7 = ssub.s32 1, %s5
  %s8 = scalar_select 0, %s7, %s5
  $region1: #{tpu_custom_call.1} parent=0
    #allocation4 [shape = 'u8[512]{0}', space=smem, size = 0x200, scoped, tag = 'input window, operand 0, single buffered']
    #allocation5 [shape = 's32[2]{0}', space=sflag, size = 0x8, scoped, tag = 'scoped memory for tpu_custom_call.1']
    #allocation6 [shape = 's32[2]{0}', space=sflag, size = 0x8, scoped, tag = 'scoped memory for tpu_custom_call.1']
    #allocation7 [shape = 's32[2]{0}', space=sflag, size = 0x8, scoped, tag = 'scoped memory for tpu_custom_call.1']
    #allocation8 [shape = 'u8[212992]{0}', space=vmem, size = 0x34000, scoped, tag = 'input window, operand 1']
    #allocation9 [shape = 'u8[1024]{0}', space=vmem, size = 0x400, scoped, tag = 'output window, operand 0']
    #allocation10 [shape = 'u8[1024]{0}', space=vmem, size = 0x400, scoped, tag = 'output window, operand 1']
    #allocation11 [shape = 's32[2]{0}', space=sflag, size = 0x8, scoped, tag = 'scoped memory for tpu_custom_call.1']
    %9 = vsyncpa [#allocation7], 0
    %10 = vsyncpa [#allocation5], 0
    %s11 = scalar_lea.sflag [#allocation5], 1
    %12 = vsyncpa %s11, 0
    %13 = vsyncpa [#allocation6], 0
    %s14 = scalar_lea.sflag [#allocation6], 1
    %15 = vsyncpa %s14, 0
    %16 = vsyncpa [#allocation11], 0
    %s17 = scalar_lea.sflag [#allocation11], 1
    %18 = vsyncpa %s17, 0
    loop: start=0, step=1, limit=6
    $region2: #{tpu_custom_call.1} parent=1 // loop_pre_header
      _
    $region3: #{tpu_custom_call.1} parent=1 // loop_header
      %s20 = sphi 0, %s24
      %p21 = scmp.ge.s32.totalorder %s20, 6
      %s27 = sphi 0, %s39
      %s28 = sphi 0, %s35
      %s29 = sphi 0, %s27
      %s30 = sphi 0, %s28
      %s31 = sphi 0, %s29
      %s32 = sphi 0, %s30
      %s40 = sphi 0, %s40
      %s42 = sphi 0, %s40
      %s43 = sphi 0, %s42
      %s57 = sphi 0, %s43
      %s67 = sphi 0, %s69
      %s70 = sphi 0, %s67
      %s71 = sphi 0, %s70
      %s87 = sphi 0, %s71
      %s93 = sphi 0, %s95
      %s96 = sphi 0, %s93
      %s97 = sphi 0, %s96
      %s113 = sphi 0, %s97
      %s119 = sphi 0, %s121
      %s122 = sphi 0, %s119
      %s123 = sphi 0, %s122
      %s139 = sphi 0, %s123
    $region4: #{tpu_custom_call.1} parent=1 // loop_header_branch
      %23 = sbr.rel (%p21) target = $region8
    $region5: #{tpu_custom_call.1} parent=1 // loop_body
      %s25 = ssub.s32 %s20, 1
      %s26 = ssub.s32 %s20, 2
      %s33 = sadd.s32 1, %s28
      %p34 = scmp.ge.s32.totalorder %s33, 2
      %s35 = scalar_select %p34, 0, %s33
      %s36 = sadd.s32 1, %s27
      %s37 = scalar_select %p34, %s36, %s27
      %p38 = scmp.ge.s32.totalorder %s37, 2
      %s39 = scalar_select %p38, 0, %s37
      %s41 = sadd.s32 %s40, 1
      %p44 = scmp.eq.s32.totalorder %s20, 3
      %p45 = scmp.ne.s32.totalorder %s40, %s42
      %p46 = scmp.eq.s32.totalorder %s20, 0
      %p47 = por %p45, %p46
      %p48 = scmp.ne.s32.totalorder %s40, %s42
      %p49 = scmp.eq.s32.totalorder %s25, 3
      %p50 = por %p48, %p49
      %p51 = scmp.ne.s32.totalorder %s42, %s43
      %p52 = scmp.eq.s32.totalorder %s25, 0
      %p53 = por %p51, %p52
      %p54 = scmp.ne.s32.totalorder %s42, %s43
      %p55 = scmp.eq.s32.totalorder %s26, 3
      %p56 = por %p54, %p55
      %p58 = scmp.ne.s32.totalorder %s43, %s57
      %p59 = scmp.eq.s32.totalorder %s26, 0
      %p60 = por %p58, %p59
      %s61 = smul.u32 %s27, 2
      %s62 = sadd.s32 %s61, %s28
      %s63 = smul.u32 %s39, 2
      %s64 = sadd.s32 %s63, %s35
      %s65 = ssub.s32 %s62, %s64
      %p66 = scmp.eq.s32.totalorder %s65, 0
      %s68 = sadd.s32 %s67, 1
      %s69 = scalar_select %p66, %s67, %s68
      %p72 = pneg %p66
      %p73 = scmp.eq.s32.totalorder %s20, 3
      %p74 = por %p72, %p73
      %p75 = scmp.ne.s32.totalorder %s67, %s70
      %p76 = scmp.eq.s32.totalorder %s20, 0
      %p77 = por %p75, %p76
      %p78 = scmp.ne.s32.totalorder %s67, %s70
      %p79 = scmp.eq.s32.totalorder %s25, 3
      %p80 = por %p78, %p79
      %p81 = scmp.ne.s32.totalorder %s70, %s71
      %p82 = scmp.eq.s32.totalorder %s25, 0
      %p83 = por %p81, %p82
      %p84 = scmp.ne.s32.totalorder %s70, %s71
      %p85 = scmp.eq.s32.totalorder %s26, 3
      %p86 = por %p84, %p85
      %p88 = scmp.ne.s32.totalorder %s71, %s87
      %p89 = scmp.eq.s32.totalorder %s26, 0
      %p90 = por %p88, %p89
      %s91 = ssub.s32 %s27, %s39
      %p92 = scmp.eq.s32.totalorder %s91, 0
      %s94 = sadd.s32 %s93, 1
      %s95 = scalar_select %p92, %s93, %s94
      %p98 = pneg %p92
      %p99 = scmp.eq.s32.totalorder %s20, 3
      %p100 = por %p98, %p99
      %p101 = scmp.ne.s32.totalorder %s93, %s96
      %p102 = scmp.eq.s32.totalorder %s20, 0
      %p103 = por %p101, %p102
      %p104 = scmp.ne.s32.totalorder %s93, %s96
      %p105 = scmp.eq.s32.totalorder %s25, 3
      %p106 = por %p104, %p105
      %p107 = scmp.ne.s32.totalorder %s96, %s97
      %p108 = scmp.eq.s32.totalorder %s25, 0
      %p109 = por %p107, %p108
      %p110 = scmp.ne.s32.totalorder %s96, %s97
      %p111 = scmp.eq.s32.totalorder %s26, 3
      %p112 = por %p110, %p111
      %p114 = scmp.ne.s32.totalorder %s97, %s113
      %p115 = scmp.eq.s32.totalorder %s26, 0
      %p116 = por %p114, %p115
      %s117 = ssub.s32 %s27, %s39
      %p118 = scmp.eq.s32.totalorder %s117, 0
      %s120 = sadd.s32 %s119, 1
      %s121 = scalar_select %p118, %s119, %s120
      %p124 = pneg %p118
      %p125 = scmp.eq.s32.totalorder %s20, 3
      %p126 = por %p124, %p125
      %p127 = scmp.ne.s32.totalorder %s119, %s122
      %p128 = scmp.eq.s32.totalorder %s20, 0
      %p129 = por %p127, %p128
      %p130 = scmp.ne.s32.totalorder %s119, %s122
      %p131 = scmp.eq.s32.totalorder %s25, 3
      %p132 = por %p130, %p131
      %p133 = scmp.ne.s32.totalorder %s122, %s123
      %p134 = scmp.eq.s32.totalorder %s25, 0
      %p135 = por %p133, %p134
      %p136 = scmp.ne.s32.totalorder %s122, %s123
      %p137 = scmp.eq.s32.totalorder %s26, 3
      %p138 = por %p136, %p137
      %p140 = scmp.ne.s32.totalorder %s123, %s139
      %p141 = scmp.eq.s32.totalorder %s26, 0
      %p142 = por %p140, %p141
      %p143 = scmp.le.s32.totalorder 1, %s20
      %p144 = scmp.lt.s32.totalorder %s20, 5
      %p145 = pnand %p143, %p144
      %p146 = pneg %p145
      // Predicated region
      $region9: #{tpu_custom_call.1} parent=5 // pred_check
        _
      $region10: #{tpu_custom_call.1} parent=5 // pred_check_branch
        %148 = sbr.rel (%p145) target = $region12
      $region11: #{tpu_custom_call.1} parent=5 // pred_region
        %s149 = ssub.s32 %s20, 1
        // Predicated region
        $region13: #{tpu_custom_call.1} parent=11 // pred_check
          %p150 = pneg %p53
        $region14: #{tpu_custom_call.1} parent=11 // pred_check_branch
          %152 = sbr.rel (%p150) target = $region16
        $region15: #{tpu_custom_call.1} parent=11 // pred_region
          %s154 = ssub.s32 16, 16
          %155 = vsyncadd [#allocation7], %s154
          %158 = dma.hbm_to_smem %s0, 16, [#allocation4], [#allocation7]
        $region16: #{tpu_custom_call.1} parent=11 // pred_fallthru
          _
      $region12: #{tpu_custom_call.1} parent=5 // pred_fallthru
        _
      %p159 = scmp.lt.s32.totalorder %s20, 4
      // Predicated region
      $region17: #{tpu_custom_call.1} parent=5 // pred_check
        %p160 = pneg %p159
      $region18: #{tpu_custom_call.1} parent=5 // pred_check_branch
        %162 = sbr.rel (%p160) target = $region20
      $region19: #{tpu_custom_call.1} parent=5 // pred_region
        // Predicated region
        $region21: #{tpu_custom_call.1} parent=19 // pred_check
          %p163 = pneg %p77
        $region22: #{tpu_custom_call.1} parent=19 // pred_check_branch
          %165 = sbr.rel (%p163) target = $region24
        $region23: #{tpu_custom_call.1} parent=19 // pred_region
          %s166 = sand.u32 %s67, 1
          %s167 = scalar_lea.sflag [#allocation5], %s166
          %s168 = sand.u32 %s67, 1
          %s169 = smul.addr %s168, 208
          %s170 = scalar_lea.vmem [#allocation8], %s169
          %s171 = smul.u32 %s27, 2
          %s172 = sadd.s32 %s171, %s28
          %s174 = ssub.s32 3328, 3328
          %175 = vsyncadd %s167, %s174
          %s176 = smul.addr %s172, 128
          %s177 = scalar_lea.hbm %s1, %s176
          %s178 = sshll.u32 %s170, 4
          %s179 = int_to_ptr.vmem [resolvable:$true] %s178
          %184 = dma.hbm_to_vmem [thread:$0]  %s177, 3328, %s179, %s167, 512, 128, 8
        $region24: #{tpu_custom_call.1} parent=19 // pred_fallthru
          _
      $region20: #{tpu_custom_call.1} parent=5 // pred_fallthru
        _
      %p185 = scmp.le.s32.totalorder 1, %s20
      %p186 = scmp.lt.s32.totalorder %s20, 5
      %p187 = pnand %p185, %p186
      %p188 = pneg %p187
      // Predicated region
      $region25: #{tpu_custom_call.1} parent=5 // pred_check
        _
      $region26: #{tpu_custom_call.1} parent=5 // pred_check_branch
        %190 = sbr.rel (%p187) target = $region28
      $region27: #{tpu_custom_call.1} parent=5 // pred_region
        %s191 = ssub.s32 %s20, 1
        // Predicated region
        $region29: #{tpu_custom_call.1} parent=27 // pred_check
          %p192 = pneg %p53
        $region30: #{tpu_custom_call.1} parent=27 // pred_check_branch
          %194 = sbr.rel (%p192) target = $region32
        $region31: #{tpu_custom_call.1} parent=27 // pred_region
          %195 = dma.done [#allocation7], 16
        $region32: #{tpu_custom_call.1} parent=27 // pred_fallthru
          _
        %s196 = sand.u32 %s70, 1
        %s197 = scalar_lea.sflag [#allocation5], %s196
        %s198 = sand.u32 %s70, 1
        %s199 = smul.addr %s198, 208
        %s200 = scalar_lea.vmem [#allocation8], %s199
        // Predicated region
        $region33: #{tpu_custom_call.1} parent=27 // pred_check
          %p201 = pneg %p83
        $region34: #{tpu_custom_call.1} parent=27 // pred_check_branch
          %203 = sbr.rel (%p201) target = $region36
        $region35: #{tpu_custom_call.1} parent=27 // pred_region
          %204 = dma.done %s197, 3328
        $region36: #{tpu_custom_call.1} parent=27 // pred_fallthru
          _
        %205 = sfence
        %p206 = pneg %p53
        %p207 = pneg %p50
        %s208 = sand.u32 %s70, 1
        %s209 = scalar_lea.sflag [#allocation5], %s208
        %s210 = sand.u32 %s70, 1
        %s211 = smul.addr %s210, 208
        %s212 = scalar_lea.vmem [#allocation8], %s211
        %p213 = pneg %p83
        %p214 = pneg %p80
        %p215 = pneg %p109
        %p216 = pneg %p106
        %s217 = sand.u32 %s96, 1
        %s218 = scalar_lea.sflag [#allocation6], %s217
        %s219 = sand.u32 %s96, 1
        %s220 = scalar_lea.vmem [#allocation9], %s219
        %p221 = pneg %p135
        %p222 = pneg %p132
        %s223 = sand.u32 %s122, 1
        %s224 = scalar_lea.sflag [#allocation11], %s223
        %s225 = sand.u32 %s122, 1
        %s226 = scalar_lea.vmem [#allocation10], %s225
        %s227 = smul.u32 %s29, 2
        %s228 = sadd.s32 %s227, %s30
        %p229 = scmp.eq.s32.totalorder %s30, 0
        // Predicated region
        $region37: #{tpu_custom_call.1} parent=27 // pred_check
          %p230 = pneg %p229
        $region38: #{tpu_custom_call.1} parent=27 // pred_check_branch
          %232 = sbr.rel (%p230) target = $region40
        $region39: #{tpu_custom_call.1} parent=27 // pred_region
          %vm233 = vcmask 0
          %234 = vst.msk [vmem:[#allocation2] sm:$0x1] %vm233, -inf
          %235 = vst.msk [vmem:[#allocation3] sm:$0x1] %vm233, 0.0
        $region40: #{tpu_custom_call.1} parent=27 // pred_fallthru
          _
        %v236 = vld [vmem:[%s200] sm:$0xff]
        %s237 = sld [smem:[#allocation4]]
        %v238 = vstv %s237
        %v239 = vmul.f32 %v236, %v238
        %s240 = scalar_lea.vmem %s200, 8 [#allocation8]
        %v241 = vld [vmem:[%s240] sm:$0xff]
        %s242 = sld [smem:[#allocation4 + $0x1]]
        %v243 = vstv %s242
        %v244 = vmul.f32 %v241, %v243
        %v245 = vadd.f32 %v239, %v244
        %s246 = scalar_lea.vmem %s200, 16 [#allocation8]
        %v247 = vld [vmem:[%s246] sm:$0xff]
        %s248 = sld [smem:[#allocation4 + $0x2]]
        %v249 = vstv %s248
        %v250 = vmul.f32 %v247, %v249
        %v251 = vadd.f32 %v245, %v250
        %s252 = scalar_lea.vmem %s200, 24 [#allocation8]
        %v253 = vld [vmem:[%s252] sm:$0xff]
        %s254 = sld [smem:[#allocation4 + $0x3]]
        %v255 = vstv %s254
        %v256 = vmul.f32 %v253, %v255
        %v257 = vadd.f32 %v251, %v256
        %s258 = scalar_lea.vmem %s200, 32 [#allocation8]
        %v259 = vld [vmem:[%s258] sm:$0xff]
        %s260 = sld [smem:[#allocation4 + $0x4]]
        %v261 = vstv %s260
        %v262 = vmul.f32 %v259, %v261
        %v263 = vadd.f32 %v257, %v262
        %s264 = scalar_lea.vmem %s200, 40 [#allocation8]
        %v265 = vld [vmem:[%s264] sm:$0xff]
        %s266 = sld [smem:[#allocation4 + $0x5]]
        %v267 = vstv %s266
        %v268 = vmul.f32 %v265, %v267
        %v269 = vadd.f32 %v263, %v268
        %s270 = scalar_lea.vmem %s200, 48 [#allocation8]
        %v271 = vld [vmem:[%s270] sm:$0xff]
        %s272 = sld [smem:[#allocation4 + $0x6]]
        %v273 = vstv %s272
        %v274 = vmul.f32 %v271, %v273
        %v275 = vadd.f32 %v269, %v274
        %s276 = scalar_lea.vmem %s200, 56 [#allocation8]
        %v277 = vld [vmem:[%s276] sm:$0xff]
        %s278 = sld [smem:[#allocation4 + $0x7]]
        %v279 = vstv %s278
        %v280 = vmul.f32 %v277, %v279
        %v281 = vadd.f32 %v275, %v280
        %s282 = scalar_lea.vmem %s200, 64 [#allocation8]
        %v283 = vld [vmem:[%s282] sm:$0xff]
        %s284 = sld [smem:[#allocation4 + $0x8]]
        %v285 = vstv %s284
        %v286 = vmul.f32 %v283, %v285
        %v287 = vadd.f32 %v281, %v286
        %s288 = scalar_lea.vmem %s200, 72 [#allocation8]
        %v289 = vld [vmem:[%s288] sm:$0xff]
        %s290 = sld [smem:[#allocation4 + $0x9]]
        %v291 = vstv %s290
        %v292 = vmul.f32 %v289, %v291
        %v293 = vadd.f32 %v287, %v292
        %s294 = scalar_lea.vmem %s200, 80 [#allocation8]
        %v295 = vld [vmem:[%s294] sm:$0xff]
        %s296 = sld [smem:[#allocation4 + $0xa]]
        %v297 = vstv %s296
        %v298 = vmul.f32 %v295, %v297
        %v299 = vadd.f32 %v293, %v298
        %s300 = scalar_lea.vmem %s200, 88 [#allocation8]
        %v301 = vld [vmem:[%s300] sm:$0xff]
        %s302 = sld [smem:[#allocation4 + $0xb]]
        %v303 = vstv %s302
        %v304 = vmul.f32 %v301, %v303
        %v305 = vadd.f32 %v299, %v304
        %s306 = scalar_lea.vmem %s200, 96 [#allocation8]
        %v307 = vld [vmem:[%s306] sm:$0xff]
        %s308 = sld [smem:[#allocation4 + $0xc]]
        %v309 = vstv %s308
        %v310 = vmul.f32 %v307, %v309
        %v311 = vadd.f32 %v305, %v310
        %s312 = scalar_lea.vmem %s200, 104 [#allocation8]
        %v313 = vld [vmem:[%s312] sm:$0xff]
        %s314 = sld [smem:[#allocation4 + $0xd]]
        %v315 = vstv %s314
        %v316 = vmul.f32 %v313, %v315
        %v317 = vadd.f32 %v311, %v316
        %s318 = scalar_lea.vmem %s200, 112 [#allocation8]
        %v319 = vld [vmem:[%s318] sm:$0xff]
        %s320 = sld [smem:[#allocation4 + $0xe]]
        %v321 = vstv %s320
        %v322 = vmul.f32 %v319, %v321
        %v323 = vadd.f32 %v317, %v322
        %s324 = scalar_lea.vmem %s200, 120 [#allocation8]
        %v325 = vld [vmem:[%s324] sm:$0xff]
        %s326 = sld [smem:[#allocation4 + $0xf]]
        %v327 = vstv %s326
        %v328 = vmul.f32 %v325, %v327
        %v329 = vadd.f32 %v323, %v328
        %s330 = scalar_lea.vmem %s200, 128 [#allocation8]
        %v331 = vld [vmem:[%s330] sm:$0xff]
        %s332 = sld [smem:[#allocation4 + $0x10]]
        %v333 = vstv %s332
        %v334 = vmul.f32 %v331, %v333
        %v335 = vadd.f32 %v329, %v334
        %s336 = scalar_lea.vmem %s200, 136 [#allocation8]
        %v337 = vld [vmem:[%s336] sm:$0xff]
        %s338 = sld [smem:[#allocation4 + $0x11]]
        %v339 = vstv %s338
        %v340 = vmul.f32 %v337, %v339
        %v341 = vadd.f32 %v335, %v340
        %s342 = scalar_lea.vmem %s200, 144 [#allocation8]
        %v343 = vld [vmem:[%s342] sm:$0xff]
        %s344 = sld [smem:[#allocation4 + $0x12]]
        %v345 = vstv %s344
        %v346 = vmul.f32 %v343, %v345
        %v347 = vadd.f32 %v341, %v346
        %s348 = scalar_lea.vmem %s200, 152 [#allocation8]
        %v349 = vld [vmem:[%s348] sm:$0xff]
        %s350 = sld [smem:[#allocation4 + $0x13]]
        %v351 = vstv %s350
        %v352 = vmul.f32 %v349, %v351
        %v353 = vadd.f32 %v347, %v352
        %s354 = scalar_lea.vmem %s200, 160 [#allocation8]
        %v355 = vld [vmem:[%s354] sm:$0xff]
        %s356 = sld [smem:[#allocation4 + $0x14]]
        %v357 = vstv %s356
        %v358 = vmul.f32 %v355, %v357
        %v359 = vadd.f32 %v353, %v358
        %s360 = scalar_lea.vmem %s200, 168 [#allocation8]
        %v361 = vld [vmem:[%s360] sm:$0xff]
        %s362 = sld [smem:[#allocation4 + $0x15]]
        %v363 = vstv %s362
        %v364 = vmul.f32 %v361, %v363
        %v365 = vadd.f32 %v359, %v364
        %s366 = scalar_lea.vmem %s200, 176 [#allocation8]
        %v367 = vld [vmem:[%s366] sm:$0xff]
        %s368 = sld [smem:[#allocation4 + $0x16]]
        %v369 = vstv %s368
        %v370 = vmul.f32 %v367, %v369
        %v371 = vadd.f32 %v365, %v370
        %s372 = scalar_lea.vmem %s200, 184 [#allocation8]
        %v373 = vld [vmem:[%s372] sm:$0xff]
        %s374 = sld [smem:[#allocation4 + $0x17]]
        %v375 = vstv %s374
        %v376 = vmul.f32 %v373, %v375
        %v377 = vadd.f32 %v371, %v376
        %s378 = scalar_lea.vmem %s200, 192 [#allocation8]
        %v379 = vld [vmem:[%s378] sm:$0xff]
        %s380 = sld [smem:[#allocation4 + $0x18]]
        %v381 = vstv %s380
        %v382 = vmul.f32 %v379, %v381
        %v383 = vadd.f32 %v377, %v382
        %s384 = scalar_lea.vmem %s200, 200 [#allocation8]
        %v385 = vld [vmem:[%s384] sm:$0xff]
        %s386 = sld [smem:[#allocation4 + $0x19]]
        %v387 = vstv %s386
        %v388 = vmul.f32 %v385, %v387
        %v389 = vadd.f32 %v383, %v388
        %390 = vadd.xlane.f32.xlu0 %v389
        %v391 = vpop.xlane.xlu0 %390
        %s392 = smul.u32 %s29, 2
        %s393 = sadd.s32 %s392, %s30
        %s394 = smul.u32 %s393, 8
        %v395 = vlaneseq
        %v396 = vshrl.u32 %v395, 7
        %v397 = vstv %s394
        %v398 = vadd.s32 %v397, %v396
        %vm399 = vcmp.lt.s32.totalorder %v398, 20
        %v400 = vsel %vm399, %v391, -inf
        %v401 = vld [vmem:[#allocation2] sm:$0x1]
        %v402 = vrot.slane %v400, 4
        %v403 = vmax.f32 %v400, %v402
        %v404 = vrot.slane %v403, 2
        %v405 = vmax.f32 %v403, %v404
        %v406 = vrot.slane %v405, 1
        %v407 = vmax.f32 %v405, %v406
        %s408 = vtos %v407
        %v409 = vstv %s408
        %v410 = vmax.f32 %v401, %v409
        %v411 = vmax.f32 %v410, -1e+30
        %v412 = vld [vmem:[#allocation3] sm:$0x1]
        %v413 = vsub.f32 %v401, %v411
        %v414 = vmul.f32 %v413, 1.442695
        %v415 = vpow.pop %v414
        %v416 = vmul.f32 %v412, %v415
        %v418 = vlaneseq
        %v419 = vshrl.u32 %v418, 7
        %v420 = vsub.s32 0, %v419
        %v421 = vrot.slane %v411, %v420
        %v423 = vsub.f32 %v400, %v421
        %v424 = vmul.f32 %v423, 1.442695
        %v425 = vpow.pop %v424
        %vm426 = vcmask 7168
        %v427 = vsel %vm426, %v425, 0.0
        %428 = vadd.xlane.f32.xlu0 %v427
        %v429 = vpop.xlane.xlu0 %428
        %v430 = vrot.slane %v429, 4
        %v431 = vadd.f32 %v429, %v430
        %v432 = vrot.slane %v431, 2
        %v433 = vadd.f32 %v431, %v432
        %v434 = vrot.slane %v433, 1
        %v435 = vadd.f32 %v433, %v434
        %s436 = vtos %v435
        %v437 = vstv %s436
        %v438 = vadd.f32 %v416, %v437
        %vm439 = vcmask 0
        %440 = vst.msk [vmem:[#allocation3] sm:$0x1] %vm439, %v438
        %441 = vst.msk [vmem:[#allocation2] sm:$0x1] %vm439, %v410
        %p442 = scmp.eq.s32.totalorder %s30, 1
        // Predicated region
        $region41: #{tpu_custom_call.1} parent=27 // pred_check
          %p443 = pneg %p442
        $region42: #{tpu_custom_call.1} parent=27 // pred_check_branch
          %445 = sbr.rel (%p443) target = $region44
        $region43: #{tpu_custom_call.1} parent=27 // pred_region
          %v446 = vld [vmem:[#allocation2] sm:$0x1]
          %448 = vset.pattern.permute.xlu0 0
          %449 = vperm.xlu0 %448, %v446
          %v450 = vpop.permute.xlu0 %449
          %v452 = vlaneseq
          %v453 = vshrl.u32 %v452, 7
          %v454 = vsub.s32 0, %v453
          %v455 = vrot.slane %v450, %v454
          %456 = vst [vmem:[%s220] sm:$0x1] %v455
          %v457 = vld [vmem:[#allocation3] sm:$0x1]
          %459 = vset.pattern.permute.xlu0 0
          %460 = vperm.xlu0 %459, %v457
          %v461 = vpop.permute.xlu0 %460
          %v463 = vlaneseq
          %v464 = vshrl.u32 %v463, 7
          %v465 = vsub.s32 0, %v464
          %v466 = vrot.slane %v461, %v465
          %467 = vst [vmem:[%s226] sm:$0x1] %v466
        $region44: #{tpu_custom_call.1} parent=27 // pred_fallthru
          _
        %s468 = sand.u32 %s96, 1
        %s469 = scalar_lea.sflag [#allocation6], %s468
        %s470 = sand.u32 %s96, 1
        %s471 = scalar_lea.vmem [#allocation9], %s470
        %s472 = sand.u32 %s122, 1
        %s473 = scalar_lea.sflag [#allocation11], %s472
        %s474 = sand.u32 %s122, 1
        %s475 = scalar_lea.vmem [#allocation10], %s474
        // Predicated region
        $region45: #{tpu_custom_call.1} parent=27 // pred_check
          %p476 = pneg %p106
        $region46: #{tpu_custom_call.1} parent=27 // pred_check_branch
          %478 = sbr.rel (%p476) target = $region48
        $region47: #{tpu_custom_call.1} parent=27 // pred_region
          %s480 = ssub.s32 16, 16
          %481 = vsyncadd %s469, %s480
          %s482 = smul.addr %s29, 16
          %s483 = scalar_lea.hbm %s2, %s482
          %s485 = sshll.u32 %s471, 4
          %s486 = int_to_ptr.vmem [resolvable:$true] %s485
          %488 = dma.vmem_to_hbm [thread:$0]  %s486, 16, %s483, %s469
        $region48: #{tpu_custom_call.1} parent=27 // pred_fallthru
          _
        // Predicated region
        $region49: #{tpu_custom_call.1} parent=27 // pred_check
          %p489 = pneg %p132
        $region50: #{tpu_custom_call.1} parent=27 // pred_check_branch
          %491 = sbr.rel (%p489) target = $region52
        $region51: #{tpu_custom_call.1} parent=27 // pred_region
          %s493 = ssub.s32 16, 16
          %494 = vsyncadd %s473, %s493
          %s495 = smul.addr %s29, 16
          %s496 = scalar_lea.hbm %s3, %s495
          %s498 = sshll.u32 %s475, 4
          %s499 = int_to_ptr.vmem [resolvable:$true] %s498
          %501 = dma.vmem_to_hbm [thread:$0]  %s499, 16, %s496, %s473
        $region52: #{tpu_custom_call.1} parent=27 // pred_fallthru
          _
      $region28: #{tpu_custom_call.1} parent=5 // pred_fallthru
        _
      %p502 = scmp.le.s32.totalorder 2, %s20
      // Predicated region
      $region53: #{tpu_custom_call.1} parent=5 // pred_check
        %p503 = pneg %p502
      $region54: #{tpu_custom_call.1} parent=5 // pred_check_branch
        %505 = sbr.rel (%p503) target = $region56
      $region55: #{tpu_custom_call.1} parent=5 // pred_region
        %s506 = ssub.s32 %s20, 2
        // Predicated region
        $region57: #{tpu_custom_call.1} parent=55 // pred_check
          %p507 = pneg %p112
        $region58: #{tpu_custom_call.1} parent=55 // pred_check_branch
          %509 = sbr.rel (%p507) target = $region60
        $region59: #{tpu_custom_call.1} parent=55 // pred_region
          %s510 = sand.u32 %s97, 1
          %s511 = scalar_lea.sflag [#allocation6], %s510
          %s512 = sand.u32 %s97, 1
          %s513 = scalar_lea.vmem [#allocation9], %s512
          %514 = dma.done %s511, 16
        $region60: #{tpu_custom_call.1} parent=55 // pred_fallthru
          _
        // Predicated region
        $region61: #{tpu_custom_call.1} parent=55 // pred_check
          %p515 = pneg %p138
        $region62: #{tpu_custom_call.1} parent=55 // pred_check_branch
          %517 = sbr.rel (%p515) target = $region64
        $region63: #{tpu_custom_call.1} parent=55 // pred_region
          %s518 = sand.u32 %s123, 1
          %s519 = scalar_lea.sflag [#allocation11], %s518
          %s520 = sand.u32 %s123, 1
          %s521 = scalar_lea.vmem [#allocation10], %s520
          %522 = dma.done %s519, 16
        $region64: #{tpu_custom_call.1} parent=55 // pred_fallthru
          _
      $region56: #{tpu_custom_call.1} parent=5 // pred_fallthru
        _
    $region6: #{tpu_custom_call.1} parent=1 // loop_footer
      %s24 = sadd.s32 1, %s20
    $region7: #{tpu_custom_call.1} parent=1 // loop_footer_branch
      %19 = sbr.rel target = $region3
    $region8: #{tpu_custom_call.1} parent=1 // loop_exit
      _
    %523 = vsyncpa [#allocation5], 1
    %s524 = scalar_lea.sflag [#allocation5], 1
    %525 = vsyncpa %s524, 1
    %526 = vsyncpa [#allocation6], 1
    %s527 = scalar_lea.sflag [#allocation6], 1
    %528 = vsyncpa %s527, 1
    %529 = vsyncpa [#allocation11], 1
    %s530 = scalar_lea.sflag [#allocation11], 1
    %531 = vsyncpa %s530, 1
    %532 = vsyncpa [#allocation7], 1
    %s533 = scalar_lea.sflag [#allocation7], 1
    %534 = vsyncpa %s533, 1

</llo_original>
